<compile_context>
chip_gen: v6e
topology: v6e:2x2x1
jax: 0.10.0
libtpu: 0.0.40
codegen_flags: <defaults>
</compile_context>

<pallas_src>
import functools

import jax
import jax.numpy as jnp
from jax.experimental import pallas as pl
from jax.experimental.pallas import tpu as pltpu


def _sparse_kernel(x_ref, o_ref, *, k):
    x = x_ref[...]
    o_ref[...] = jnp.where(x < k, jnp.zeros_like(x), x)


# ~4 MiB per block => 2 arrays x 2 pipeline buffers ~ 16 MiB of VMEM.
_TARGET_BLOCK_BYTES = 4 * 1024 * 1024
_VMEM_LIMIT_BYTES = 32 * 1024 * 1024


def _choose_lane_width(total_elems):
    """Largest multiple-of-128 lane width that divides the element count."""
    for cand in (8192, 4096, 2048, 1024, 512, 384, 256, 128):
        if total_elems % cand == 0:
            return cand
    return None


@jax.jit
def sparse_forward(x):
    """Equivalent of Sparse.forward(X) for a float array (any layout)."""
    batch_size = x.shape[0]
    k = 100.0 / batch_size  # static: depends only on the static batch size

    orig_shape = x.shape
    total = x.size
    itemsize = jnp.dtype(x.dtype).itemsize
    # Sublane quantum: 8 for f32, 16 for bf16, 32 for int8/fp8.
    q = max(8, 32 // itemsize)

    # Lane-dense slab when possible (pure metadata reshape of the contiguous
    # buffer — no transpose, no extra HBM pass).
    lane_width = _choose_lane_width(total)
    if lane_width is not None:
        x2 = x.reshape(-1, lane_width)
    else:
        # Fallback: keep the original trailing dim as the lane dim. Full-dim
        # lane blocks are always layout-legal; stores may be masked if the
        # trailing dim is not a multiple of 128, but correctness is preserved.
        x2 = x.reshape(-1, orig_shape[-1])
    M, N = x2.shape

    # Row-block size: ~_TARGET_BLOCK_BYTES per block, rounded down to the
    # sublane quantum; a single full-extent block for small arrays.
    row_bytes = N * itemsize
    tm = (_TARGET_BLOCK_BYTES // max(row_bytes, 1)) // q * q
    tm = max(tm, q)
    if tm >= M:
        tm = M
    grid = (pl.cdiv(M, tm),)

    out2 = pl.pallas_call(
        functools.partial(_sparse_kernel, k=k),
        out_shape=jax.ShapeDtypeStruct((M, N), x.dtype),
        grid_spec=pl.GridSpec(
            grid=grid,
            in_specs=[pl.BlockSpec((tm, N), lambda i: (i, 0))],
            out_specs=pl.BlockSpec((tm, N), lambda i: (i, 0)),
        ),
        compiler_params=pltpu.CompilerParams(
            dimension_semantics=("parallel",),
            vmem_limit_bytes=_VMEM_LIMIT_BYTES,
        ),
    )(x2)

    return out2.reshape(orig_shape)


if __name__ == "__main__":
    key = jax.random.PRNGKey(0)
    # batch=2, channels=4, spatial=16x16. Scale so some values exceed k=50.
    x = jax.random.uniform(key, (2, 4, 16, 16), dtype=jnp.float32) * 100.0

    y = sparse_forward(x)
    y = jax.block_until_ready(y)

    # Pure-JAX reference check.
    k_ref = 100.0 / x.shape[0]
    y_ref = jnp.where(x < k_ref, 0.0, x)
    assert y.shape == x.shape and y.dtype == x.dtype
    assert jnp.allclose(y, y_ref), "mismatch vs reference"

    print("KERNEL_OK")
</pallas_src>

<mosaic_0001>
module attributes {stable_mosaic.version = 11 : i64} {
  func.func @_sparse_kernel(%arg0: i32, %arg1: memref<1x2048xf32, #tpu.memory_space<vmem>>, %arg2: memref<1x2048xf32, #tpu.memory_space<vmem>>) attributes {dimension_semantics = [#tpu.dimension_semantics<parallel>], iteration_bounds = array<i64: 1>, scalar_prefetch = 0 : i64, scratch_operands = 0 : i64, tpu.core_type = #tpu.core_type<tc>, window_params = [{transform_indices = @transform_0, window_bounds = array<i64: 1, 2048>}, {transform_indices = @transform_1, window_bounds = array<i64: 1, 2048>}]} {
    %c0 = arith.constant 0 : index
    %c0_0 = arith.constant 0 : index
    %0 = vector.load %arg1[%c0, %c0_0] : memref<1x2048xf32, #tpu.memory_space<vmem>>, vector<1x2048xf32>
    %cst = arith.constant 5.000000e+01 : f32
    %1 = vector.broadcast %cst : f32 to vector<1x2048xf32>
    %2 = arith.cmpf olt, %0, %1 : vector<1x2048xf32>
    %cst_1 = arith.constant 0.000000e+00 : f32
    %3 = vector.broadcast %cst_1 : f32 to vector<1x2048xf32>
    %4 = arith.select %2, %3, %0 : vector<1x2048xi1>, vector<1x2048xf32>
    %c0_2 = arith.constant 0 : index
    %c0_3 = arith.constant 0 : index
    %5 = vector.load %arg2[%c0_2, %c0_3] : memref<1x2048xf32, #tpu.memory_space<vmem>>, vector<1x2048xf32>
    tpu.vector_store %arg2[%c0_2, %c0_3], %4 {strides = array<i32>} : memref<1x2048xf32, #tpu.memory_space<vmem>>, vector<1x2048xf32>,
    return
  }
  func.func @transform_0(%arg0: i32) -> (i32, i32) {
    %c0_i32 = arith.constant 0 : i32
    %c0_i32_0 = arith.constant 0 : i32
    return %arg0, %c0_i32 : i32, i32
  }
  func.func @transform_1(%arg0: i32) -> (i32, i32) {
    %c0_i32 = arith.constant 0 : i32
    %c0_i32_0 = arith.constant 0 : i32
    return %arg0, %c0_i32 : i32, i32
  }
}

</mosaic_0001>

<llo_original>
// kernel: sparse_forward.1
$region0: #{sparse_forward.1}
  #allocation0 [shape = 'u32[]', space=smem, size = 0x4, offset = 0x4, fixed_abs, tag = 'smem constant byte address 0x4 - core index']
  #allocation1 [shape = 'u32[144,128]{1,0:T(1,128)}', space=vmem, size = 0x12000, scoped, tag = 'internal scratch']
  %s0 = inlined_call_operand.vmem [shape: f32[1,2048], index: 0, kind: input, shape index: {}]
  %s1 = inlined_call_operand.vmem [shape: f32[1,2048], index: 1, kind: output, shape index: {}]
  %s2 = sld [smem:[#allocation0]]
  $region14: #{sparse_forward.1} parent=0
    _
  %s4 = ssub.s32 1, %s2
  %s5 = scalar_select 0, %s4, %s2
  // Predicated region
  $region2: #{sparse_forward.1} parent=0 // pred_check
    _
  $region3: #{sparse_forward.1} parent=0 // pred_check_branch
    %7 = sbr.rel (0) target = $region5
  $region4: #{sparse_forward.1} parent=0 // pred_region
    _
  $region5: #{sparse_forward.1} parent=0 // pred_fallthru
    _
  %v8 = vld [vmem:[%s0] sm:$0xff]
  %v9 = vld [vmem:[%s0 + $0x8] sm:$0xff]
  %vm10 = vcmp.lt.f32.partialorder %v8, 50.0
  %vm11 = vcmp.lt.f32.partialorder %v9, 50.0
  %v12 = vsel %vm10, 0.0, %v8
  %v13 = vsel %vm11, 0.0, %v9
  %14 = vst [vmem:[%s1] sm:$0xff] %v12
  %15 = vst [vmem:[%s1 + $0x8] sm:$0xff] %v13
  // Predicated region
  $region6: #{sparse_forward.1} parent=0 // pred_check
    _
  $region7: #{sparse_forward.1} parent=0 // pred_check_branch
    %17 = sbr.rel (0) target = $region9
  $region8: #{sparse_forward.1} parent=0 // pred_region
    _
  $region9: #{sparse_forward.1} parent=0 // pred_fallthru
    _
  // Predicated region
  $region10: #{sparse_forward.1} parent=0 // pred_check
    _
  $region11: #{sparse_forward.1} parent=0 // pred_check_branch
    %19 = sbr.rel (0) target = $region13
  $region12: #{sparse_forward.1} parent=0 // pred_region
    _
  $region13: #{sparse_forward.1} parent=0 // pred_fallthru
    _

</llo_original>
